<compile_context>
chip_gen: v5e
topology: v5e:2x2
jax: 0.10.0
libtpu: 0.0.40
codegen_flags: <defaults>
</compile_context>

<pallas_src>
import jax
import jax.numpy as jnp
from jax.experimental import pallas as pl
from jax.experimental.pallas import tpu as pltpu

INIT_NORM_STD = 0.02


def _uv_pos_embed_kernel(idx_ref, table_ref, out_ref):
    # idx_ref:   (tile_rows, fold)           int32, pre-offset by r * num_pos
    # table_ref: (fold*num_pos, fold*hidden) block-diagonal embedding table
    # out_ref:   (tile_rows, fold*hidden)
    fold = idx_ref.shape[1]
    tile_rows = out_ref.shape[0]
    rows_mm = table_ref.shape[0]
    table = table_ref[...]

    idxs = idx_ref[...]
    iota = jax.lax.broadcasted_iota(jnp.int32, (tile_rows, rows_mm), 1)
    onehot = jnp.zeros((tile_rows, rows_mm), table.dtype)
    for r in range(fold):  # fold is a small static constant (128 // hidden)
        onehot = onehot + (iota == idxs[:, r:r + 1]).astype(table.dtype)

    # Row gather of the (block-diagonal) table as a one-hot matmul on the MXU.
    out_ref[...] = jnp.dot(onehot, table,
                           preferred_element_type=jnp.float32).astype(out_ref.dtype)


def uv_pos_embedding_forward(pos, positional_embeddings, *, width, tile_rows=None):
    """pos: (N, 2) float in [0, 1); positional_embeddings: (1, num_pos, hidden)
    or (num_pos, hidden).  Returns (1, N, hidden) matching the PyTorch module."""
    table = positional_embeddings
    if table.ndim == 3:
        table = table[0]
    num_pos, hidden = table.shape
    n = pos.shape[0]

    # --- index precompute (cheap fused XLA elementwise, kept out of the kernel) ---
    p = jnp.floor(pos.astype(jnp.float32) * width).astype(jnp.int32)
    idx = p[:, 0] * width + p[:, 1] + 1
    # Guard pos components outside [0, 1): PyTorch would raise an OOB index
    # error; we clamp so the kernel stays defined (identity for valid inputs).
    idx = jnp.clip(idx, 0, num_pos - 1).astype(jnp.int32)

    # --- lane-density fold: pack `fold` consecutive rows into the lane dim ---
    if hidden < 128 and 128 % hidden == 0:
        fold = 128 // hidden
    else:
        fold = 1
    n_pad = ((n + fold - 1) // fold) * fold   # pad N so fold always divides it
    if n_pad != n:
        idx = jnp.concatenate(
            [idx, jnp.zeros((n_pad - n,), jnp.int32)], axis=0)
    n_rows = n_pad // fold
    out_cols = fold * hidden
    rows_mm = fold * num_pos

    idx_packed = (idx.reshape(n_rows, fold)
                  + (jnp.arange(fold, dtype=jnp.int32) * num_pos)[None, :])
    if fold > 1:
        # Block-diagonal table: one MXU matmul row emits `fold` embeddings,
        # concatenated along lanes.  (Pure function of the parameter; in
        # production this can be precomputed once outside the forward.)
        table_mm = jnp.kron(jnp.eye(fold, dtype=table.dtype), table)
    else:
        table_mm = table

    # --- tile selection: multiple of 8, bounded VMEM, >=2 grid steps when possible ---
    if tile_rows is None:
        if n_rows <= 8:
            tile_rows = n_rows
        else:
            vmem_cap_rows = max(8, ((4 << 20) // (out_cols * 4 * 2)) // 8 * 8)
            half_rows = max(8, (n_rows // 2) // 8 * 8)
            tile_rows = min(512, vmem_cap_rows, half_rows)
    grid = (pl.cdiv(n_rows, tile_rows),)

    # Explicit VMEM budget: double-buffered out/idx blocks + resident table
    # (2 bufs by default) + one-hot intermediate, with headroom.
    tile_bytes = (2 * tile_rows * out_cols * 4
                  + 2 * tile_rows * fold * 4
                  + 2 * rows_mm * out_cols * 4
                  + tile_rows * rows_mm * 4)
    vmem_limit = int(min(max(4 * tile_bytes, 16 << 20), 48 << 20))

    cost = pl.CostEstimate(
        flops=2 * n_rows * rows_mm * out_cols,
        transcendentals=0,
        bytes_accessed=(n_rows * fold * 4
                        + rows_mm * out_cols * table.dtype.itemsize
                        + n_rows * out_cols * table.dtype.itemsize),
    )

    out = pl.pallas_call(
        _uv_pos_embed_kernel,
        out_shape=jax.ShapeDtypeStruct((n_rows, out_cols), table.dtype),
        grid_spec=pltpu.PrefetchScalarGridSpec(
            num_scalar_prefetch=0,
            grid=grid,
            in_specs=[
                pl.BlockSpec((tile_rows, fold), lambda i: (i, 0)),    # packed indices
                pl.BlockSpec((rows_mm, out_cols), lambda i: (0, 0)),  # full (folded) table
            ],
            out_specs=pl.BlockSpec((tile_rows, out_cols), lambda i: (i, 0)),
        ),
        compiler_params=pltpu.CompilerParams(
            dimension_semantics=("parallel",),
            vmem_limit_bytes=vmem_limit,
        ),
        cost_estimate=cost,
    )(idx_packed, table_mm)

    # Free row-major view back to (N, hidden); leading axis matches
    # positional_embeddings[:, idx].
    return out.reshape(n_pad, hidden)[:n][None]


def uv_pos_embedding_reference(pos, positional_embeddings, *, width):
    p = jnp.floor(pos * width)
    idx = (p[:, 0] * width + p[:, 1] + 1.0).astype(jnp.int32)
    return positional_embeddings[:, idx]


if __name__ == "__main__":
    # Module config (small): hidden_size=32, patch_size=4, img_dim=16
    hidden_size = 32
    patch_size = 4
    img_dim = 16
    width = img_dim // patch_size            # width_pos_embeddings = 4
    num_pos = width * width + 1              # 17 = grid positions + cls slot

    key = jax.random.PRNGKey(0)
    k_table, k_pos1, k_pos2, k_pos3 = jax.random.split(key, 4)

    # Parameter init: normal(mean=0, std=0.02), like init_embedding_param.
    positional_embeddings = (INIT_NORM_STD
                             * jax.random.normal(k_table, (1, num_pos, hidden_size),
                                                 dtype=jnp.float32))

    # Check 1: N=8 UV coordinates in [0, 1)  (single-tile path).
    pos_a = jax.random.uniform(k_pos1, (8, 2), dtype=jnp.float32)
    out_a = jax.block_until_ready(
        uv_pos_embedding_forward(pos_a, positional_embeddings, width=width))
    ref_a = uv_pos_embedding_reference(pos_a, positional_embeddings, width=width)
    assert out_a.shape == (1, 8, hidden_size), out_a.shape
    assert jnp.allclose(out_a, ref_a, atol=1e-6), "mismatch vs reference (N=8)"

    # Check 2: N=64 exercises the lane-fold + multi-step (2-program) grid path.
    pos_b = jax.random.uniform(k_pos2, (64, 2), dtype=jnp.float32)
    out_b = jax.block_until_ready(
        uv_pos_embedding_forward(pos_b, positional_embeddings, width=width))
    ref_b = uv_pos_embedding_reference(pos_b, positional_embeddings, width=width)
    assert out_b.shape == (1, 64, hidden_size), out_b.shape
    assert jnp.allclose(out_b, ref_b, atol=1e-6), "mismatch vs reference (N=64)"

    # Check 3: N=10 (not a multiple of fold) exercises the padded lane-fold path.
    pos_c = jax.random.uniform(k_pos3, (10, 2), dtype=jnp.float32)
    out_c = jax.block_until_ready(
        uv_pos_embedding_forward(pos_c, positional_embeddings, width=width))
    ref_c = uv_pos_embedding_reference(pos_c, positional_embeddings, width=width)
    assert out_c.shape == (1, 10, hidden_size), out_c.shape
    assert jnp.allclose(out_c, ref_c, atol=1e-6), "mismatch vs reference (N=10)"

    print("KERNEL_OK")
</pallas_src>

<mosaic_0001>
module attributes {stable_mosaic.version = 11 : i64} {
  func.func @_uv_pos_embed_kernel(%arg0: i32, %arg1: memref<2x4xi32, #tpu.memory_space<vmem>>, %arg2: memref<68x128xf32, #tpu.memory_space<vmem>>, %arg3: memref<2x128xf32, #tpu.memory_space<vmem>>) attributes {dimension_semantics = [#tpu.dimension_semantics<parallel>], iteration_bounds = array<i64: 1>, scalar_prefetch = 0 : i64, scratch_operands = 0 : i64, tpu.core_type = #tpu.core_type<tc>, window_params = [{transform_indices = @transform_0, window_bounds = array<i64: 2, 4>}, {pipeline_mode = #tpu.pipeline_mode<synchronous>, transform_indices = @transform_1, window_bounds = array<i64: 68, 128>}, {transform_indices = @transform_2, window_bounds = array<i64: 2, 128>}]} {
    %c0 = arith.constant 0 : index
    %c0_0 = arith.constant 0 : index
    %0 = vector.load %arg2[%c0, %c0_0] : memref<68x128xf32, #tpu.memory_space<vmem>>, vector<68x128xf32>
    %c0_1 = arith.constant 0 : index
    %c0_2 = arith.constant 0 : index
    %1 = vector.load %arg1[%c0_1, %c0_2] : memref<2x4xi32, #tpu.memory_space<vmem>>, vector<2x4xi32>
    %2 = tpu.iota {dimensions = array<i32: 1>} : vector<2x68xi32>
    %cst = arith.constant 0.000000e+00 : f32
    %3 = vector.broadcast %cst : f32 to vector<2x68xf32>
    %4 = vector.extract_strided_slice %1 {offsets = [0, 0], sizes = [2, 1], strides = [1, 1]} : vector<2x4xi32> to vector<2x1xi32>
    %5 = vector.broadcast %4 : vector<2x1xi32> to vector<2x68xi32>
    %6 = arith.cmpi eq, %2, %5 : vector<2x68xi32>
    %7 = arith.extui %6 : vector<2x68xi1> to vector<2x68xi32>
    %8 = arith.sitofp %7 : vector<2x68xi32> to vector<2x68xf32>
    %9 = arith.addf %3, %8 : vector<2x68xf32>
    %10 = vector.extract_strided_slice %1 {offsets = [0, 1], sizes = [2, 1], strides = [1, 1]} : vector<2x4xi32> to vector<2x1xi32>
    %11 = vector.broadcast %10 : vector<2x1xi32> to vector<2x68xi32>
    %12 = arith.cmpi eq, %2, %11 : vector<2x68xi32>
    %13 = arith.extui %12 : vector<2x68xi1> to vector<2x68xi32>
    %14 = arith.sitofp %13 : vector<2x68xi32> to vector<2x68xf32>
    %15 = arith.addf %9, %14 : vector<2x68xf32>
    %16 = vector.extract_strided_slice %1 {offsets = [0, 2], sizes = [2, 1], strides = [1, 1]} : vector<2x4xi32> to vector<2x1xi32>
    %17 = vector.broadcast %16 : vector<2x1xi32> to vector<2x68xi32>
    %18 = arith.cmpi eq, %2, %17 : vector<2x68xi32>
    %19 = arith.extui %18 : vector<2x68xi1> to vector<2x68xi32>
    %20 = arith.sitofp %19 : vector<2x68xi32> to vector<2x68xf32>
    %21 = arith.addf %15, %20 : vector<2x68xf32>
    %22 = vector.extract_strided_slice %1 {offsets = [0, 3], sizes = [2, 1], strides = [1, 1]} : vector<2x4xi32> to vector<2x1xi32>
    %23 = vector.broadcast %22 : vector<2x1xi32> to vector<2x68xi32>
    %24 = arith.cmpi eq, %2, %23 : vector<2x68xi32>
    %25 = arith.extui %24 : vector<2x68xi1> to vector<2x68xi32>
    %26 = arith.sitofp %25 : vector<2x68xi32> to vector<2x68xf32>
    %27 = arith.addf %21, %26 : vector<2x68xf32>
    %cst_3 = arith.constant dense<0.000000e+00> : vector<2x128xf32>
    %28 = tpu.matmul %27, %0, %cst_3 {dimension_numbers = #tpu.dot_dimension_numbers<[1], [0], [0], [1], [0, 0, 1, 1], [], []>} : vector<2x68xf32>, vector<68x128xf32>, vector<2x128xf32> -> vector<2x128xf32>
    %c0_4 = arith.constant 0 : index
    %c0_5 = arith.constant 0 : index
    %29 = vector.load %arg3[%c0_4, %c0_5] : memref<2x128xf32, #tpu.memory_space<vmem>>, vector<2x128xf32>
    tpu.vector_store %arg3[%c0_4, %c0_5], %28 {strides = array<i32>} : memref<2x128xf32, #tpu.memory_space<vmem>>, vector<2x128xf32>,
    return
  }
  func.func @transform_0(%arg0: i32) -> (i32, i32) {
    %c0_i32 = arith.constant 0 : i32
    %c0_i32_0 = arith.constant 0 : i32
    return %arg0, %c0_i32 : i32, i32
  }
  func.func @transform_1(%arg0: i32) -> (i32, i32) {
    %c0_i32 = arith.constant 0 : i32
    %c0_i32_0 = arith.constant 0 : i32
    %c0_i32_1 = arith.constant 0 : i32
    return %c0_i32, %c0_i32_0 : i32, i32
  }
  func.func @transform_2(%arg0: i32) -> (i32, i32) {
    %c0_i32 = arith.constant 0 : i32
    %c0_i32_0 = arith.constant 0 : i32
    return %arg0, %c0_i32 : i32, i32
  }
}

</mosaic_0001>

<llo_original>
// kernel: tpu_custom_call.1
$region0: #{tpu_custom_call.1}
  #allocation0 [shape = 'u32[]', space=smem, size = 0x4, offset = 0x4, fixed_abs, tag = 'smem constant byte address 0x4 - core index']
  #allocation1 [shape = 'u32[72,128]{1,0:T(1,128)}', space=vmem, size = 0x9000, scoped, tag = 'internal scratch']
  %s0 = inlined_call_operand.hbm [shape: s32[2,4], index: 0, kind: input, shape index: {}]
  %s1 = inlined_call_operand.hbm [shape: f32[68,128], index: 1, kind: input, shape index: {}]
  %s2 = inlined_call_operand.hbm [shape: f32[2,128], index: 2, kind: output, shape index: {}]
  %s3 = sld [smem:[#allocation0]]
  $region26: #{tpu_custom_call.1} parent=0
    _
  %s5 = ssub.s32 1, %s3
  %s6 = scalar_select 0, %s5, %s3
  $region1: #{tpu_custom_call.1} parent=0
    #allocation2 [shape = 'u8[1024]{0}', space=vmem, size = 0x400, scoped, tag = 'input window, operand 0, single buffered']
    #allocation3 [shape = 's32[1]{0}', space=sflag, size = 0x4, scoped, tag = 'scoped memory for tpu_custom_call.1']
    #allocation4 [shape = 's32[1]{0}', space=sflag, size = 0x4, scoped, tag = 'scoped memory for tpu_custom_call.1']
    #allocation5 [shape = 'u8[36864]{0}', space=vmem, size = 0x9000, scoped, tag = 'input window, operand 1, single buffered']
    #allocation6 [shape = 's32[1]{0}', space=sflag, size = 0x4, scoped, tag = 'scoped memory for tpu_custom_call.1']
    #allocation7 [shape = 'u8[1024]{0}', space=vmem, size = 0x400, scoped, tag = 'output window, operand 0, single buffered']
    %7 = vsyncpa [#allocation3], 0
    %8 = vsyncpa [#allocation6], 0
    %9 = vsyncpa [#allocation4], 0
    // Predicated region
    $region2: #{tpu_custom_call.1} parent=1 // pred_check
      _
    $region3: #{tpu_custom_call.1} parent=1 // pred_check_branch
      %11 = sbr.rel (0) target = $region5
    $region4: #{tpu_custom_call.1} parent=1 // pred_region
      %13 = vsyncadd [#allocation3], 0
      %s15 = sshll.u32 %s0, 4
      %s16 = int_to_ptr.hbm [resolvable:$true] %s15
      %s17 = sshll.u32 [#allocation2], 4
      %s18 = int_to_ptr.vmem [resolvable:$true] %s17
      %20 = dma.hbm_to_vmem [thread:$0]  %s16, 32, %s18, [#allocation3]
    $region5: #{tpu_custom_call.1} parent=1 // pred_fallthru
      _
    // Predicated region
    $region6: #{tpu_custom_call.1} parent=1 // pred_check
      _
    $region7: #{tpu_custom_call.1} parent=1 // pred_check_branch
      %22 = sbr.rel (0) target = $region9
    $region8: #{tpu_custom_call.1} parent=1 // pred_region
      %24 = vsyncadd [#allocation6], 0
      %s25 = sshll.u32 %s1, 4
      %s26 = int_to_ptr.hbm [resolvable:$true] %s25
      %s27 = sshll.u32 [#allocation5], 4
      %s28 = int_to_ptr.vmem [resolvable:$true] %s27
      %33 = dma.hbm_to_vmem [thread:$0]  %s26, 1152, %s28, [#allocation6], 128, 128, 8
    $region9: #{tpu_custom_call.1} parent=1 // pred_fallthru
      _
    // Predicated region
    $region10: #{tpu_custom_call.1} parent=1 // pred_check
      _
    $region11: #{tpu_custom_call.1} parent=1 // pred_check_branch
      %35 = sbr.rel (0) target = $region13
    $region12: #{tpu_custom_call.1} parent=1 // pred_region
      %37 = dma.done [#allocation3], 32
    $region13: #{tpu_custom_call.1} parent=1 // pred_fallthru
      _
    // Predicated region
    $region14: #{tpu_custom_call.1} parent=1 // pred_check
      _
    $region15: #{tpu_custom_call.1} parent=1 // pred_check_branch
      %39 = sbr.rel (0) target = $region17
    $region16: #{tpu_custom_call.1} parent=1 // pred_region
      %41 = dma.done [#allocation6], 1152
    $region17: #{tpu_custom_call.1} parent=1 // pred_fallthru
      _
    %v42 = vld [vmem:[#allocation5] sm:$0xff]
    %v43 = vld [vmem:[#allocation5 + $0x8] sm:$0xff]
    %v44 = vld [vmem:[#allocation5 + $0x10] sm:$0xff]
    %v45 = vld [vmem:[#allocation5 + $0x18] sm:$0xff]
    %v46 = vld [vmem:[#allocation5 + $0x20] sm:$0xff]
    %v47 = vld [vmem:[#allocation5 + $0x28] sm:$0xff]
    %v48 = vld [vmem:[#allocation5 + $0x30] sm:$0xff]
    %v49 = vld [vmem:[#allocation5 + $0x38] sm:$0xff]
    %v50 = vld [vmem:[#allocation5 + $0x40] sm:$0xf]
    %v51 = vld [vmem:[#allocation2] sm:$0x3]
    %v52 = vlaneseq
    %v53 = vand.u32 %v52, 127
    %54 = vset.pattern.permute.xlu0 0
    %55 = vperm.xlu0 %54, %v51
    %v56 = vpop.permute.xlu0 %55
    %vm57 = vcmp.eq.s32.totalorder %v53, %v56
    %v58 = vsel %vm57, 1, 0
    %v59 = vcvt.s32.f32 %v58
    %v60 = vadd.f32 %v59, 0.0
    %61 = vset.pattern.permute.xlu0 1
    %62 = vperm.xlu0 %61, %v51
    %v63 = vpop.permute.xlu0 %62
    %vm64 = vcmp.eq.s32.totalorder %v53, %v63
    %v65 = vsel %vm64, 1, 0
    %v66 = vcvt.s32.f32 %v65
    %v67 = vadd.f32 %v60, %v66
    %68 = vset.pattern.permute.xlu0 2
    %69 = vperm.xlu0 %68, %v51
    %v70 = vpop.permute.xlu0 %69
    %vm71 = vcmp.eq.s32.totalorder %v53, %v70
    %v72 = vsel %vm71, 1, 0
    %v73 = vcvt.s32.f32 %v72
    %v74 = vadd.f32 %v67, %v73
    %75 = vset.pattern.permute.xlu0 3
    %76 = vperm.xlu0 %75, %v51
    %v77 = vpop.permute.xlu0 %76
    %vm78 = vcmp.eq.s32.totalorder %v53, %v77
    %v79 = vsel %vm78, 1, 0
    %v80 = vcvt.s32.f32 %v79
    %v81 = vadd.f32 %v74, %v80
    %vm82 = vcmask 556032
    %v84 = vsel %vm82, %v81, 0
    %vm86 = vcmask 1043456
    %v88 = vsel %vm86, %v50, 0
    %90 = vmatpush.msra.mxu0 0.0
    %91 = vmatpush.msra.mxu0 0.0
    %92 = vmatpush.msra.mxu0 0.0
    %93 = vmatpush.msra.mxu0 0.0
    %94 = vmatpush.msra.mxu0 0.0
    %95 = vmatpush.msra.mxu0 0.0
    %96 = vmatpush.msra.mxu0 0.0
    %97 = vmatpush.msra.mxu0 %v88
    %98 = vmatpush.msra.mxu0 %v49
    %99 = vmatpush.msra.mxu0 %v48
    %100 = vmatpush.msra.mxu0 %v47
    %101 = vmatpush.msra.mxu0 %v46
    %102 = vmatpush.msra.mxu0 %v45
    %103 = vmatpush.msra.mxu0 %v44
    %104 = vmatpush.msra.mxu0 %v43
    %105 = vmatpush.msra.mxu0 %v42
    %106 = vmatmul.f32.gmra.mxu0 %v84
    %v107 = vpop.f32.mrf.mxu0
    %v108 = vadd.f32 0.0, %v107
    %109 = vdwg.mxu0
    %110 = vst [vmem:[#allocation7] sm:$0x3] %v108
    // Predicated region
    $region18: #{tpu_custom_call.1} parent=1 // pred_check
      _
    $region19: #{tpu_custom_call.1} parent=1 // pred_check_branch
      %112 = sbr.rel (0) target = $region21
    $region20: #{tpu_custom_call.1} parent=1 // pred_region
      %114 = vsyncadd [#allocation4], 0
      %s116 = sshll.u32 [#allocation7], 4
      %s117 = int_to_ptr.vmem [resolvable:$true] %s116
      %s118 = sshll.u32 %s2, 4
      %s119 = int_to_ptr.hbm [resolvable:$true] %s118
      %121 = dma.vmem_to_hbm [thread:$0]  %s117, 32, %s119, [#allocation4]
    $region21: #{tpu_custom_call.1} parent=1 // pred_fallthru
      _
    // Predicated region
    $region22: #{tpu_custom_call.1} parent=1 // pred_check
      _
    $region23: #{tpu_custom_call.1} parent=1 // pred_check_branch
      %123 = sbr.rel (0) target = $region25
    $region24: #{tpu_custom_call.1} parent=1 // pred_region
      %125 = dma.done [#allocation4], 32
    $region25: #{tpu_custom_call.1} parent=1 // pred_fallthru
      _
    %126 = vsyncpa [#allocation3], 1
    %127 = vsyncpa [#allocation6], 1
    %128 = vsyncpa [#allocation4], 1

</llo_original>
